<compile_context>
chip_gen: v6e
topology: v6e:2x2x1
jax: 0.10.0
libtpu: 0.0.40
codegen_flags: <defaults>
</compile_context>

<pallas_src>
import functools

import jax
import jax.numpy as jnp
from jax.experimental import pallas as pl
from jax.experimental.pallas import tpu as pltpu

_EPS = 1e-6        # nn.PairwiseDistance default eps
_CLAMP_MIN = 0.02  # torch.clamp(..., min=0.02)
_MiB = 1024 * 1024


def _round_up(x, m):
    return ((x + m - 1) // m) * m


def _vmem_config():
    """Generation-aware VMEM budgets (input working set / tile caps / scoped limit)."""
    try:
        cap = pltpu.get_tpu_info().vmem_capacity_bytes
    except Exception:
        cap = 64 * _MiB  # conservative fallback (v7x-sized)
    if cap >= 96 * _MiB:
        # v5e / v6e: 128 MiB per TC -> use it instead of leaving half idle.
        return dict(budget=56 * _MiB, max_tk=4096, max_tm=1024, limit=96 * _MiB)
    # v7x: 64 MiB physical per TC -> stay conservative, leave compiler headroom.
    return dict(budget=24 * _MiB, max_tk=2048, max_tm=512, limit=40 * _MiB)


def _choose_tk(d, *, max_tk):
    """Feature-dim tile: full D when small, else a multiple-of-128 divisor of D."""
    if d <= max_tk:
        return d
    for tk in range(max_tk, 0, -128):      # max_tk, max_tk-128, ..., 128
        if d % tk == 0:
            return tk
    return d  # no nice divisor -> full feature dim (tm shrinks to compensate)


def _choose_tm(n, tk, g_k, itemsize, *, max_tm, vmem_budget_bytes, min_steps=8):
    """Row tile: sized against the VMEM budget (3 input streams x 2 pipeline
    buffers), aligned for sublane packing, then shrunk until the grid has at
    least `min_steps` total steps (>= ~4 pipelined steps per TC on v7x)."""
    sub = max(8, 32 // itemsize)           # 8 (f32) / 16 (bf16) / 32 (int8)
    tm = vmem_budget_bytes // (3 * 2 * tk * itemsize)
    tm = max(sub, min(max_tm, (tm // sub) * sub))
    n_al = _round_up(n, sub)
    tm = min(tm, n_al)
    while (n_al // tm) * g_k < min_steps and tm > sub:
        tm = max(sub, (tm // 2 // sub) * sub)
    return tm


def _accumulate(acc_ref, sq, tk, acc_w):
    """acc_ref[(tm, acc_w)] += lane-chunked sums of sq[(tm, tk)] (VPU-only adds)."""
    acc = acc_ref[...]
    n_full = tk // acc_w
    for c in range(n_full):                     # static unrolled loop
        acc = acc + sq[:, c * acc_w:(c + 1) * acc_w]
    rem = tk - n_full * acc_w
    if rem:
        tail = jnp.pad(sq[:, n_full * acc_w:], ((0, 0), (0, acc_w - rem)))
        acc = acc + tail
    acc_ref[...] = acc


def _triplet_kernel(alpha_ref, a_ref, p_ref, n_ref, o_ref, sp_ref, sn_ref, *,
                    tk, acc_w):
    k = pl.program_id(1)

    @pl.when(k == 0)
    def _init():
        sp_ref[...] = jnp.zeros_like(sp_ref)
        sn_ref[...] = jnp.zeros_like(sn_ref)

    # Cast BEFORE adding eps (keeps 1e-6 from flushing to 0 for bf16 inputs).
    a = a_ref[...].astype(jnp.float32)
    p = p_ref[...].astype(jnp.float32)
    n = n_ref[...].astype(jnp.float32)

    # PairwiseDistance adds eps to the difference before the norm.
    dp = a - p + _EPS
    dn = a - n + _EPS

    # Deferred reduction: per-step VPU adds only; no per-step XLU work.
    _accumulate(sp_ref, dp * dp, tk, acc_w)
    _accumulate(sn_ref, dn * dn, tk, acc_w)

    @pl.when(k == pl.num_programs(1) - 1)
    def _finalize():
        alpha = alpha_ref[0]
        s_d = jnp.sqrt(jnp.sum(sp_ref[...], axis=-1, keepdims=True))   # (tm, 1)
        n_d = jnp.sqrt(jnp.sum(sn_ref[...], axis=-1, keepdims=True))   # (tm, 1)
        res = jnp.maximum(s_d - n_d + alpha, _CLAMP_MIN)               # (tm, 1)
        # Lane-dense store: one small XLU transpose -> unmasked vst writeback.
        o_ref[...] = jnp.transpose(res)[None]                          # (1, 1, tm)


def triplet_loss(a_x, p_x, n_x, alpha, *, tm=None, tk=None):
    """Pallas TripletLoss forward. a_x/p_x/n_x: (N, D) (f32 or bf16). Returns (N,) f32."""
    N, D = a_x.shape
    itemsize = jnp.dtype(a_x.dtype).itemsize
    cfg = _vmem_config()

    if tk is None:
        tk = _choose_tk(D, max_tk=cfg["max_tk"])
    assert D % tk == 0, (D, tk)
    g_k = D // tk

    if tm is None:
        tm = _choose_tm(N, tk, g_k, itemsize,
                        max_tm=cfg["max_tm"], vmem_budget_bytes=cfg["budget"])
    sub = max(8, 32 // itemsize)
    assert tm % sub == 0, (tm, sub)

    # Pad ragged batch to a multiple of tm (padded rows are sliced off below).
    n_pad = _round_up(N, tm)
    if n_pad != N:
        pad = ((0, n_pad - N), (0, 0))
        a_x = jnp.pad(a_x, pad)
        p_x = jnp.pad(p_x, pad)
        n_x = jnp.pad(n_x, pad)

    g_rows = n_pad // tm
    acc_w = min(tk, 128)                    # width of the deferred-reduce accumulator

    alpha_arr = jnp.asarray([alpha], dtype=jnp.float32)   # runtime SMEM scalar
    kernel = functools.partial(_triplet_kernel, tk=tk, acc_w=acc_w)

    out = pl.pallas_call(
        kernel,
        out_shape=jax.ShapeDtypeStruct((g_rows, 1, tm), jnp.float32),
        grid_spec=pltpu.PrefetchScalarGridSpec(
            num_scalar_prefetch=0,
            grid=(g_rows, g_k),                      # reduction axis (D) last
            in_specs=[
                pl.BlockSpec(memory_space=pltpu.MemorySpace.SMEM),     # alpha
                pl.BlockSpec((tm, tk), lambda i, k: (i, k)),
                pl.BlockSpec((tm, tk), lambda i, k: (i, k)),
                pl.BlockSpec((tm, tk), lambda i, k: (i, k)),
            ],
            out_specs=pl.BlockSpec((1, 1, tm), lambda i, k: (i, 0, 0)),
            scratch_shapes=[
                pltpu.VMEM((tm, acc_w), jnp.float32),   # partial sums (a-p+eps)^2
                pltpu.VMEM((tm, acc_w), jnp.float32),   # partial sums (a-n+eps)^2
            ],
        ),
        compiler_params=pltpu.CompilerParams(
            dimension_semantics=("parallel", "arbitrary"),
            vmem_limit_bytes=cfg["limit"],
        ),
    )(alpha_arr, a_x, p_x, n_x)

    return out.reshape(n_pad)[:N]


if __name__ == "__main__":
    key = jax.random.PRNGKey(0)
    k1, k2, k3 = jax.random.split(key, 3)

    N, D = 8, 32   # small shapes: batch=8, embedding dim=32
    alpha = 0.5

    a_x = jax.random.normal(k1, (N, D), dtype=jnp.float32)
    p_x = jax.random.normal(k2, (N, D), dtype=jnp.float32)
    n_x = jax.random.normal(k3, (N, D), dtype=jnp.float32)

    def ref_fn(a, p, n, alph):
        a = a.astype(jnp.float32)
        p = p.astype(jnp.float32)
        n = n.astype(jnp.float32)
        s_d = jnp.linalg.norm(a - p + _EPS, axis=-1)
        n_d = jnp.linalg.norm(a - n + _EPS, axis=-1)
        return jnp.maximum(s_d - n_d + alph, _CLAMP_MIN)

    # f32 path
    out = jax.block_until_ready(triplet_loss(a_x, p_x, n_x, alpha))
    assert out.shape == (N,), out.shape
    assert jnp.allclose(out, ref_fn(a_x, p_x, n_x, alpha), atol=1e-5, rtol=1e-5)

    # Different margin: alpha is a runtime SMEM scalar (no per-alpha recompile).
    out2 = jax.block_until_ready(triplet_loss(a_x, p_x, n_x, 1.25))
    assert jnp.allclose(out2, ref_fn(a_x, p_x, n_x, 1.25), atol=1e-5, rtol=1e-5)

    # bf16 embeddings stay bf16 in HBM (halves HBM traffic); cast done in-kernel.
    a_b, p_b, n_b = (x.astype(jnp.bfloat16) for x in (a_x, p_x, n_x))
    out_b = jax.block_until_ready(triplet_loss(a_b, p_b, n_b, alpha))
    assert jnp.allclose(out_b, ref_fn(a_b, p_b, n_b, alpha), atol=1e-4, rtol=1e-4)

    print("KERNEL_OK")
</pallas_src>

<mosaic_0001>
module attributes {stable_mosaic.version = 11 : i64} {
  func.func @_triplet_kernel(%arg0: i32, %arg1: i32, %arg2: memref<1xf32, #tpu.memory_space<smem>>, %arg3: memref<8x32xf32, #tpu.memory_space<vmem>>, %arg4: memref<8x32xf32, #tpu.memory_space<vmem>>, %arg5: memref<8x32xf32, #tpu.memory_space<vmem>>, %arg6: memref<1x1x8xf32, #tpu.memory_space<vmem>>, %arg7: memref<8x32xf32, #tpu.memory_space<vmem>>, %arg8: memref<8x32xf32, #tpu.memory_space<vmem>>) attributes {dimension_semantics = [#tpu.dimension_semantics<parallel>, #tpu.dimension_semantics<arbitrary>], iteration_bounds = array<i64: 1, 1>, scalar_prefetch = 0 : i64, scratch_operands = 2 : i64, tpu.core_type = #tpu.core_type<tc>, window_params = [{transform_indices = @transform_0, window_bounds = array<i64: 1>}, {transform_indices = @transform_1, window_bounds = array<i64: 8, 32>}, {transform_indices = @transform_2, window_bounds = array<i64: 8, 32>}, {transform_indices = @transform_3, window_bounds = array<i64: 8, 32>}, {transform_indices = @transform_4, window_bounds = array<i64: 1, 1, 8>}]} {
    %c0_i32 = arith.constant 0 : i32
    %0 = arith.cmpi eq, %arg1, %c0_i32 : i32
    %1 = arith.extui %0 : i1 to i32
    %c0_i32_0 = arith.constant 0 : i32
    %2 = arith.cmpi ne, %1, %c0_i32_0 : i32
    scf.if %2 {
      %cst_17 = arith.constant 0.000000e+00 : f32
      %23 = vector.broadcast %cst_17 : f32 to vector<8x32xf32>
      %c0_18 = arith.constant 0 : index
      %c0_19 = arith.constant 0 : index
      %24 = vector.load %arg7[%c0_18, %c0_19] : memref<8x32xf32, #tpu.memory_space<vmem>>, vector<8x32xf32>
      tpu.vector_store %arg7[%c0_18, %c0_19], %23 {strides = array<i32>} : memref<8x32xf32, #tpu.memory_space<vmem>>, vector<8x32xf32>,
      %cst_20 = arith.constant 0.000000e+00 : f32
      %25 = vector.broadcast %cst_20 : f32 to vector<8x32xf32>
      %c0_21 = arith.constant 0 : index
      %c0_22 = arith.constant 0 : index
      %26 = vector.load %arg8[%c0_21, %c0_22] : memref<8x32xf32, #tpu.memory_space<vmem>>, vector<8x32xf32>
      tpu.vector_store %arg8[%c0_21, %c0_22], %25 {strides = array<i32>} : memref<8x32xf32, #tpu.memory_space<vmem>>, vector<8x32xf32>,
    } else {
    }
    %c0 = arith.constant 0 : index
    %c0_1 = arith.constant 0 : index
    %3 = vector.load %arg3[%c0, %c0_1] : memref<8x32xf32, #tpu.memory_space<vmem>>, vector<8x32xf32>
    %c0_2 = arith.constant 0 : index
    %c0_3 = arith.constant 0 : index
    %4 = vector.load %arg4[%c0_2, %c0_3] : memref<8x32xf32, #tpu.memory_space<vmem>>, vector<8x32xf32>
    %c0_4 = arith.constant 0 : index
    %c0_5 = arith.constant 0 : index
    %5 = vector.load %arg5[%c0_4, %c0_5] : memref<8x32xf32, #tpu.memory_space<vmem>>, vector<8x32xf32>
    %6 = arith.subf %3, %4 : vector<8x32xf32>
    %cst = arith.constant 9.99999997E-7 : f32
    %7 = vector.broadcast %cst : f32 to vector<8x32xf32>
    %8 = arith.addf %6, %7 : vector<8x32xf32>
    %9 = arith.subf %3, %5 : vector<8x32xf32>
    %cst_6 = arith.constant 9.99999997E-7 : f32
    %10 = vector.broadcast %cst_6 : f32 to vector<8x32xf32>
    %11 = arith.addf %9, %10 : vector<8x32xf32>
    %12 = arith.mulf %8, %8 : vector<8x32xf32>
    %c0_7 = arith.constant 0 : index
    %c0_8 = arith.constant 0 : index
    %13 = vector.load %arg7[%c0_7, %c0_8] : memref<8x32xf32, #tpu.memory_space<vmem>>, vector<8x32xf32>
    %14 = arith.addf %13, %12 : vector<8x32xf32>
    %c0_9 = arith.constant 0 : index
    %c0_10 = arith.constant 0 : index
    %15 = vector.load %arg7[%c0_9, %c0_10] : memref<8x32xf32, #tpu.memory_space<vmem>>, vector<8x32xf32>
    tpu.vector_store %arg7[%c0_9, %c0_10], %14 {strides = array<i32>} : memref<8x32xf32, #tpu.memory_space<vmem>>, vector<8x32xf32>,
    %16 = arith.mulf %11, %11 : vector<8x32xf32>
    %c0_11 = arith.constant 0 : index
    %c0_12 = arith.constant 0 : index
    %17 = vector.load %arg8[%c0_11, %c0_12] : memref<8x32xf32, #tpu.memory_space<vmem>>, vector<8x32xf32>
    %18 = arith.addf %17, %16 : vector<8x32xf32>
    %c0_13 = arith.constant 0 : index
    %c0_14 = arith.constant 0 : index
    %19 = vector.load %arg8[%c0_13, %c0_14] : memref<8x32xf32, #tpu.memory_space<vmem>>, vector<8x32xf32>
    tpu.vector_store %arg8[%c0_13, %c0_14], %18 {strides = array<i32>} : memref<8x32xf32, #tpu.memory_space<vmem>>, vector<8x32xf32>,
    %c0_i32_15 = arith.constant 0 : i32
    %20 = arith.cmpi eq, %arg1, %c0_i32_15 : i32
    %21 = arith.extui %20 : i1 to i32
    %c0_i32_16 = arith.constant 0 : i32
    %22 = arith.cmpi ne, %21, %c0_i32_16 : i32
    scf.if %22 {
      %c0_17 = arith.constant 0 : index
      %23 = memref.load %arg2[%c0_17] : memref<1xf32, #tpu.memory_space<smem>>
      %c0_18 = arith.constant 0 : index
      %c0_19 = arith.constant 0 : index
      %24 = vector.load %arg7[%c0_18, %c0_19] : memref<8x32xf32, #tpu.memory_space<vmem>>, vector<8x32xf32>
      %cst_20 = arith.constant dense<0.000000e+00> : vector<8xf32>
      %25 = vector.multi_reduction <add>, %24, %cst_20 [1] : vector<8x32xf32> to vector<8xf32>
      %26 = vector.shape_cast %25 : vector<8xf32> to vector<8x1xf32>
      %27 = math.sqrt %26 : vector<8x1xf32>
      %c0_21 = arith.constant 0 : index
      %c0_22 = arith.constant 0 : index
      %28 = vector.load %arg8[%c0_21, %c0_22] : memref<8x32xf32, #tpu.memory_space<vmem>>, vector<8x32xf32>
      %cst_23 = arith.constant dense<0.000000e+00> : vector<8xf32>
      %29 = vector.multi_reduction <add>, %28, %cst_23 [1] : vector<8x32xf32> to vector<8xf32>
      %30 = vector.shape_cast %29 : vector<8xf32> to vector<8x1xf32>
      %31 = math.sqrt %30 : vector<8x1xf32>
      %32 = arith.subf %27, %31 : vector<8x1xf32>
      %33 = vector.broadcast %23 : f32 to vector<8x1xf32>
      %34 = arith.addf %32, %33 : vector<8x1xf32>
      %cst_24 = arith.constant 2.000000e-02 : f32
      %35 = vector.broadcast %cst_24 : f32 to vector<8x1xf32>
      %36 = arith.maximumf %34, %35 : vector<8x1xf32>
      %37 = tpu.transpose %36, [1, 0] : vector<8x1xf32> -> vector<1x8xf32>
      %38 = vector.shape_cast %37 : vector<1x8xf32> to vector<1x1x8xf32>
      %c0_25 = arith.constant 0 : index
      %c0_26 = arith.constant 0 : index
      %c0_27 = arith.constant 0 : index
      %39 = vector.load %arg6[%c0_25, %c0_26, %c0_27] : memref<1x1x8xf32, #tpu.memory_space<vmem>>, vector<1x1x8xf32>
      tpu.vector_store %arg6[%c0_25, %c0_26, %c0_27], %38 {strides = array<i32>} : memref<1x1x8xf32, #tpu.memory_space<vmem>>, vector<1x1x8xf32>,
    } else {
    }
    return
  }
  func.func @transform_0(%arg0: i32, %arg1: i32) -> i32 {
    %c0_i32 = arith.constant 0 : i32
    %c0_i32_0 = arith.constant 0 : i32
    return %c0_i32 : i32
  }
  func.func @transform_1(%arg0: i32, %arg1: i32) -> (i32, i32) {
    %c0_i32 = arith.constant 0 : i32
    return %arg0, %arg1 : i32, i32
  }
  func.func @transform_2(%arg0: i32, %arg1: i32) -> (i32, i32) {
    %c0_i32 = arith.constant 0 : i32
    return %arg0, %arg1 : i32, i32
  }
  func.func @transform_3(%arg0: i32, %arg1: i32) -> (i32, i32) {
    %c0_i32 = arith.constant 0 : i32
    return %arg0, %arg1 : i32, i32
  }
  func.func @transform_4(%arg0: i32, %arg1: i32) -> (i32, i32, i32) {
    %c0_i32 = arith.constant 0 : i32
    %c0_i32_0 = arith.constant 0 : i32
    %c0_i32_1 = arith.constant 0 : i32
    return %arg0, %c0_i32, %c0_i32_0 : i32, i32, i32
  }
}

</mosaic_0001>

<llo_original>
// kernel: tpu_custom_call.1
$region0: #{tpu_custom_call.1}
  #allocation0 [shape = 'u32[]', space=smem, size = 0x4, offset = 0x4, fixed_abs, tag = 'smem constant byte address 0x4 - core index']
  #allocation1 [shape = 'u32[144,128]{1,0:T(1,128)}', space=vmem, size = 0x12000, scoped, tag = 'internal scratch']
  #allocation2 [shape = 'f32[8,32]{1,0:T(8,128)}', space=vmem, size = 0x1000, scoped, tag = 'scratch operand']
  #allocation3 [shape = 'f32[8,32]{1,0:T(8,128)}', space=vmem, size = 0x1000, scoped, tag = 'scratch operand']
  #allocation4 [shape = 'f32[1]{0:T(128)S(6)}', space=smem, size = 0x200, scoped, tag = 'scoped memory for tpu_custom_call.1']
  %s0 = inlined_call_operand.<no memory space> [shape: f32[1], index: 0, kind: input, shape index: {}]
  %s1 = inlined_call_operand.hbm [shape: f32[8,32], index: 1, kind: input, shape index: {}]
  %s2 = inlined_call_operand.hbm [shape: f32[8,32], index: 2, kind: input, shape index: {}]
  %s3 = inlined_call_operand.hbm [shape: f32[8,32], index: 3, kind: input, shape index: {}]
  %s4 = inlined_call_operand.hbm [shape: f32[1,1,8], index: 4, kind: output, shape index: {}]
  %s5 = sld [smem:[#allocation0]]
  $region46: #{tpu_custom_call.1} parent=0
    _
  %s7 = ssub.s32 1, %s5
  %s8 = scalar_select 0, %s7, %s5
  %9 = sst [smem:[#allocation4]] %s0
  $region1: #{tpu_custom_call.1} parent=0
    #allocation5 [shape = 'u8[4096]{0}', space=vmem, size = 0x1000, scoped, tag = 'input window, operand 1, single buffered']
    #allocation6 [shape = 's32[1]{0}', space=sflag, size = 0x4, scoped, tag = 'scoped memory for tpu_custom_call.1']
    #allocation7 [shape = 's32[1]{0}', space=sflag, size = 0x4, scoped, tag = 'scoped memory for tpu_custom_call.1']
    #allocation8 [shape = 'u8[4096]{0}', space=vmem, size = 0x1000, scoped, tag = 'input window, operand 2, single buffered']
    #allocation9 [shape = 's32[1]{0}', space=sflag, size = 0x4, scoped, tag = 'scoped memory for tpu_custom_call.1']
    #allocation10 [shape = 'u8[4096]{0}', space=vmem, size = 0x1000, scoped, tag = 'input window, operand 3, single buffered']
    #allocation11 [shape = 'u8[512]{0}', space=vmem, size = 0x400, scoped, tag = 'output window, operand 0, single buffered']
    %10 = vsyncpa [#allocation6], 0
    %11 = vsyncpa [#allocation9], 0
    %12 = vsyncpa [#allocation7], 0
    // Predicated region
    $region2: #{tpu_custom_call.1} parent=1 // pred_check
      _
    $region3: #{tpu_custom_call.1} parent=1 // pred_check_branch
      %14 = sbr.rel (0) target = $region5
    $region4: #{tpu_custom_call.1} parent=1 // pred_region
      _
    $region5: #{tpu_custom_call.1} parent=1 // pred_fallthru
      _
    // Predicated region
    $region6: #{tpu_custom_call.1} parent=1 // pred_check
      _
    $region7: #{tpu_custom_call.1} parent=1 // pred_check_branch
      %16 = sbr.rel (0) target = $region9
    $region8: #{tpu_custom_call.1} parent=1 // pred_region
      %s18 = ssub.s32 128, 128
      %19 = vsyncadd [#allocation6], %s18
      %s21 = sshll.u32 [#allocation5], 4
      %s22 = int_to_ptr.vmem [resolvable:$true] %s21
      %24 = dma.hbm_to_vmem [thread:$0]  %s1, 128, %s22, [#allocation6]
    $region9: #{tpu_custom_call.1} parent=1 // pred_fallthru
      _
    // Predicated region
    $region10: #{tpu_custom_call.1} parent=1 // pred_check
      _
    $region11: #{tpu_custom_call.1} parent=1 // pred_check_branch
      %26 = sbr.rel (0) target = $region13
    $region12: #{tpu_custom_call.1} parent=1 // pred_region
      %s28 = ssub.s32 128, 128
      %29 = vsyncadd [#allocation9], %s28
      %s31 = sshll.u32 [#allocation8], 4
      %s32 = int_to_ptr.vmem [resolvable:$true] %s31
      %34 = dma.hbm_to_vmem [thread:$0]  %s2, 128, %s32, [#allocation9]
    $region13: #{tpu_custom_call.1} parent=1 // pred_fallthru
      _
    // Predicated region
    $region14: #{tpu_custom_call.1} parent=1 // pred_check
      _
    $region15: #{tpu_custom_call.1} parent=1 // pred_check_branch
      %36 = sbr.rel (0) target = $region17
    $region16: #{tpu_custom_call.1} parent=1 // pred_region
      %s38 = ssub.s32 128, 128
      %39 = vsyncadd [#allocation9], %s38
      %s41 = sshll.u32 [#allocation10], 4
      %s42 = int_to_ptr.vmem [resolvable:$true] %s41
      %44 = dma.hbm_to_vmem [thread:$0]  %s3, 128, %s42, [#allocation9]
    $region17: #{tpu_custom_call.1} parent=1 // pred_fallthru
      _
    // Predicated region
    $region18: #{tpu_custom_call.1} parent=1 // pred_check
      _
    $region19: #{tpu_custom_call.1} parent=1 // pred_check_branch
      %46 = sbr.rel (0) target = $region21
    $region20: #{tpu_custom_call.1} parent=1 // pred_region
      %47 = dma.done [#allocation6], 128
    $region21: #{tpu_custom_call.1} parent=1 // pred_fallthru
      _
    // Predicated region
    $region22: #{tpu_custom_call.1} parent=1 // pred_check
      _
    $region23: #{tpu_custom_call.1} parent=1 // pred_check_branch
      %49 = sbr.rel (0) target = $region25
    $region24: #{tpu_custom_call.1} parent=1 // pred_region
      %50 = dma.done [#allocation9], 128
    $region25: #{tpu_custom_call.1} parent=1 // pred_fallthru
      _
    // Predicated region
    $region26: #{tpu_custom_call.1} parent=1 // pred_check
      _
    $region27: #{tpu_custom_call.1} parent=1 // pred_check_branch
      %52 = sbr.rel (0) target = $region29
    $region28: #{tpu_custom_call.1} parent=1 // pred_region
      %53 = dma.done [#allocation9], 128
    $region29: #{tpu_custom_call.1} parent=1 // pred_fallthru
      _
    %p54 = scmp.eq.s32.totalorder 0, 0
    // Predicated region
    $region30: #{tpu_custom_call.1} parent=1 // pred_check
      %p55 = pneg %p54
    $region31: #{tpu_custom_call.1} parent=1 // pred_check_branch
      %57 = sbr.rel (%p55) target = $region33
    $region32: #{tpu_custom_call.1} parent=1 // pred_region
      %vm58 = vcmask 261120
      %59 = vst.msk [vmem:[#allocation2] sm:$0xff] %vm58, 0.0
      %60 = vst.msk [vmem:[#allocation3] sm:$0xff] %vm58, 0.0
    $region33: #{tpu_custom_call.1} parent=1 // pred_fallthru
      _
    %v61 = vld [vmem:[#allocation5] sm:$0xff]
    %v62 = vld [vmem:[#allocation8] sm:$0xff]
    %v63 = vld [vmem:[#allocation10] sm:$0xff]
    %v64 = vsub.f32 %v61, %v62
    %v65 = vadd.f32 %v64, 1e-06
    %v66 = vsub.f32 %v61, %v63
    %v67 = vadd.f32 %v66, 1e-06
    %v68 = vmul.f32 %v65, %v65
    %v69 = vld [vmem:[#allocation2] sm:$0xff]
    %v70 = vadd.f32 %v69, %v68
    %vm71 = vcmask 261120
    %72 = vst.msk [vmem:[#allocation2] sm:$0xff] %vm71, %v70
    %v73 = vmul.f32 %v67, %v67
    %v74 = vld [vmem:[#allocation3] sm:$0xff]
    %v75 = vadd.f32 %v74, %v73
    %76 = vst.msk [vmem:[#allocation3] sm:$0xff] %vm71, %v75
    // Predicated region
    $region34: #{tpu_custom_call.1} parent=1 // pred_check
      %p77 = pneg %p54
    $region35: #{tpu_custom_call.1} parent=1 // pred_check_branch
      %79 = sbr.rel (%p77) target = $region37
    $region36: #{tpu_custom_call.1} parent=1 // pred_region
      %s80 = sld [smem:[#allocation4]]
      %v81 = vld [vmem:[#allocation2] sm:$0xff]
      %v82 = vsel %vm71, %v81, 0.0
      %83 = vadd.xlane.f32.xlu0 %v82
      %v84 = vpop.xlane.xlu0 %83
      %v85 = vrsqrt.pop %v84
      %v86 = vmul.f32 %v84, %v85
      %vm87 = vcmp.eq.f32.partialorder %v84, inf
      %v88 = vsel %vm87, %v84, %v86
      %vm89 = vcmp.eq.f32.partialorder %v84, 0.0
      %v90 = vand.u32 %v84, 2147483648
      %v91 = vsel %vm89, %v90, %v88
      %v92 = vld [vmem:[#allocation3] sm:$0xff]
      %v93 = vsel %vm71, %v92, 0.0
      %94 = vadd.xlane.f32.xlu0 %v93
      %v95 = vpop.xlane.xlu0 %94
      %v96 = vrsqrt.pop %v95
      %v97 = vmul.f32 %v95, %v96
      %vm98 = vcmp.eq.f32.partialorder %v95, inf
      %v99 = vsel %vm98, %v95, %v97
      %vm100 = vcmp.eq.f32.partialorder %v95, 0.0
      %v101 = vand.u32 %v95, 2147483648
      %v102 = vsel %vm100, %v101, %v99
      %v103 = vsub.f32 %v91, %v102
      %v104 = vstv %s80
      %v105 = vadd.f32 %v103, %v104
      %v106 = vmax.f32 %v105, 0.02
      %107 = vxpose.xlu0.b32.start [1/16] %v106, 128
      %108 = vxpose.xlu0.b32.cont [2/16] 0.0, 128
      %109 = vxpose.xlu0.b32.cont [3/16] 0.0, 128
      %110 = vxpose.xlu0.b32.cont [4/16] 0.0, 128
      %111 = vxpose.xlu0.b32.cont [5/16] 0.0, 128
      %112 = vxpose.xlu0.b32.cont [6/16] 0.0, 128
      %113 = vxpose.xlu0.b32.cont [7/16] 0.0, 128
      %114 = vxpose.xlu0.b32.cont [8/16] 0.0, 128
      %115 = vxpose.xlu0.b32.cont [9/16] 0.0, 128
      %116 = vxpose.xlu0.b32.cont [10/16] 0.0, 128
      %117 = vxpose.xlu0.b32.cont [11/16] 0.0, 128
      %118 = vxpose.xlu0.b32.cont [12/16] 0.0, 128
      %119 = vxpose.xlu0.b32.cont [13/16] 0.0, 128
      %120 = vxpose.xlu0.b32.cont [14/16] 0.0, 128
      %121 = vxpose.xlu0.b32.cont [15/16] 0.0, 128
      %122 = vxpose.xlu0.b32.end [16/16] 0.0, 128
      %v123 = vpop.trf.xlu0
      %v124 = vpop.trf.xlu0
      %v125 = vpop.trf.xlu0
      %v126 = vpop.trf.xlu0
      %v127 = vpop.trf.xlu0
      %v128 = vpop.trf.xlu0
      %v129 = vpop.trf.xlu0
      %v130 = vpop.trf.xlu0
      %v131 = vpop.trf.xlu0
      %v132 = vpop.trf.xlu0
      %v133 = vpop.trf.xlu0
      %v134 = vpop.trf.xlu0
      %v135 = vpop.trf.xlu0
      %v136 = vpop.trf.xlu0
      %v137 = vpop.trf.xlu0
      %v138 = vpop.trf.xlu0
      %vm139 = vcmask 57344
      %140 = vst.msk [vmem:[#allocation11] sm:$0x1] %vm139, %v123
    $region37: #{tpu_custom_call.1} parent=1 // pred_fallthru
      _
    // Predicated region
    $region38: #{tpu_custom_call.1} parent=1 // pred_check
      _
    $region39: #{tpu_custom_call.1} parent=1 // pred_check_branch
      %142 = sbr.rel (0) target = $region41
    $region40: #{tpu_custom_call.1} parent=1 // pred_region
      %s144 = ssub.s32 16, 16
      %145 = vsyncadd [#allocation7], %s144
      %s147 = sshll.u32 [#allocation11], 4
      %s148 = int_to_ptr.vmem [resolvable:$true] %s147
      %150 = dma.vmem_to_hbm [thread:$0]  %s148, 16, %s4, [#allocation7]
    $region41: #{tpu_custom_call.1} parent=1 // pred_fallthru
      _
    // Predicated region
    $region42: #{tpu_custom_call.1} parent=1 // pred_check
      _
    $region43: #{tpu_custom_call.1} parent=1 // pred_check_branch
      %152 = sbr.rel (0) target = $region45
    $region44: #{tpu_custom_call.1} parent=1 // pred_region
      %153 = dma.done [#allocation7], 16
    $region45: #{tpu_custom_call.1} parent=1 // pred_fallthru
      _
    %154 = vsyncpa [#allocation6], 1
    %155 = vsyncpa [#allocation9], 1
    %156 = vsyncpa [#allocation7], 1

</llo_original>
